<compile_context>
chip_gen: v7x
topology: tpu7x:2x2x1
jax: 0.10.0
libtpu: 0.0.40
codegen_flags: <defaults>
</compile_context>

<pallas_src>
import functools

import jax
import jax.numpy as jnp
from jax import lax
from jax.experimental import pallas as pl
from jax.experimental.pallas import tpu as pltpu


def gpa_kernel(xq_ref, xkv_ref, wqs_ref, bqs_ref, wkv_ref, bkv_ref,
               out_ref, kaug_ref, v1_ref, *, n, m, compute_dtype):
    """One grid step == (batch element b, query tile t).

    xq_ref  : (1, c2, TQ)   query tile (channel-major, lane-dense)
    xkv_ref : (1, c,  N )   full xKeyValue for this batch element
    wqs_ref : (n+1+m, c2)   rows = [wq ; 0 ; wpx + [I_m|0]]
    bqs_ref : (n+1+m, 1)    rows = [bq ; 1 ; bp]
    wkv_ref : (n+m+1, c)    rows = [(2/sqrt(n))*wk ; wpa@wv ; 0]
    bkv_ref : (n+m+1, 1)    rows = [(2/sqrt(n))*bk ; wpa@bv ; 1]
    out_ref : (1, m, TQ)
    kaug_ref: (n+1, N) f32 scratch, rows = [(2/sqrt(n))*K ; -||K||^2/sqrt(n)]
    v1_ref  : (m+1, N) scratch (compute_dtype), rows = [wpa@V ; 1]
    """
    f32 = jnp.float32

    # ---- key/value work: once per batch element (hoisted out of query tiles).
    @pl.when(pl.program_id(1) == 0)
    def _():
        xkv = xkv_ref[0]                                                    # (c, N)
        kv = jnp.dot(wkv_ref[...], xkv, preferred_element_type=f32) + bkv_ref[...]
        k_s = kv[:n]                                                        # (n, N) = (2/sqrt(n)) * K
        # ksq = ||K||^2 / sqrt(n) = (sqrt(n)/4) * ||K_s||^2
        ksq = (0.25 * float(n) ** 0.5) * jnp.sum(k_s * k_s, axis=0, keepdims=True)
        kaug_ref[...] = jnp.concatenate([k_s, -ksq], axis=0)               # (n+1, N)
        v1_ref[...] = kv[n:].astype(compute_dtype)                         # (m+1, N) = [wpa@V ; 1]

    # ---- query path: Q, the energy ones-row, and the residual-included
    # x-projection all from one stacked matmul.
    xq = xq_ref[0]                                                          # (c2, TQ)
    stacked = jnp.dot(wqs_ref[...], xq, preferred_element_type=f32) + bqs_ref[...]
    q_aug = stacked[:n + 1]                                                 # (n+1, TQ) = [Q ; 1]
    proj_x = stacked[n + 1:]                                                # (m, TQ) = xq[:m] + wpx@xq + bp

    # ---- euclidean energy, key-major (N, TQ):
    #   energy[k, q] = (2 K.Q - ||K||^2) / sqrt(n)
    # (the per-query ||Q||^2 term is constant along each softmax column and is
    # dropped by shift invariance; per-column max keeps exp stable.)
    energy = lax.dot_general(kaug_ref[...], q_aug,
                             dimension_numbers=(((0,), (0,)), ((), ())),
                             preferred_element_type=f32)                    # (N, TQ)

    emax = jnp.max(energy, axis=0, keepdims=True)                           # (1, TQ)
    e = jnp.exp((energy - emax).astype(compute_dtype))                      # (N, TQ), in (0, 1]

    # [wpa@V ; 1] @ e : rows [:m] = unnormalized wpa@att, row m = softmax
    # denominator (accumulated in f32 on the MXU).
    res = jnp.dot(v1_ref[...], e, preferred_element_type=f32)               # (m+1, TQ)
    att = res[:m] * pl.reciprocal(res[m:m + 1], approx=True)                # (m, TQ)

    out_ref[0] = proj_x + att


def _softmax_compute_dtype():
    """bf16 softmax tail on bf16-capable VPUs/EUPs (v6e/v7x); f32 on v5e and older."""
    try:
        kind = jax.devices()[0].device_kind.lower()
    except Exception:
        return jnp.bfloat16
    if any(tag in kind for tag in ("v2", "v3", "v4", "v5")):
        return jnp.float32
    return jnp.bfloat16


def _pick_query_tile(n_spatial):
    # Overhead-bound at small N: collapse the query-tile axis (TQ = N, T = 1).
    # Only tile once the (N, TQ) f32 score block would get large.
    if n_spatial <= 2048 or (n_spatial % 128) != 0:
        return n_spatial, 1
    tq = 512 if (n_spatial % 512 == 0) else 128
    return tq, n_spatial // tq


def gpa_forward(x_kv, x_q, params):
    """x_kv: (B, c, H, W), x_q: (B, c2, H, W) float32 NCHW. Returns (B, m, H, W)."""
    B, c, H, W = x_kv.shape
    _, c2, Hq, Wq = x_q.shape
    assert (H, W) == (Hq, Wq)
    N = H * W
    n = params["wq"].shape[0]
    m = params["wv"].shape[0]
    assert c2 >= m, "residual xQuery[:, :m] requires c2 >= m"

    TQ, T = _pick_query_tile(N)
    cdt = _softmax_compute_dtype()

    xkv_f = x_kv.reshape(B, c, N).astype(jnp.float32)
    xq_f = x_q.reshape(B, c2, N).astype(jnp.float32)

    # ---- host-side weight packing (exact linear-algebra folds) ----
    f32 = jnp.float32
    two_over_sqrt_n = f32(2.0 / float(n) ** 0.5)
    wpx = params["wp"][:, :c2]                     # (m, c2)  concatproj, xQuery half
    wpa = params["wp"][:, c2:]                     # (m, m)   concatproj, attention half
    eye = jnp.zeros((m, c2), f32).at[:, :m].set(jnp.eye(m, dtype=f32))   # residual [I_m | 0]

    # query-path stack: rows [:n] = Q, row n = ones (energy bias row),
    # rows [n+1:] = residual-included x-projection.
    wqs = jnp.concatenate([params["wq"], jnp.zeros((1, c2), f32), wpx + eye], axis=0)
    bqs = jnp.concatenate([params["bq"], jnp.ones((1, 1), f32), params["bp"]], axis=0)

    # key/value stack: rows [:n] = (2/sqrt n)*K weights, rows [n:n+m] = wpa@V
    # weights, row n+m = ones (softmax rowsum row).
    wkv = jnp.concatenate([two_over_sqrt_n * params["wk"], wpa @ params["wv"],
                           jnp.zeros((1, c), f32)], axis=0)
    bkv = jnp.concatenate([two_over_sqrt_n * params["bk"], wpa @ params["bv"],
                           jnp.ones((1, 1), f32)], axis=0)

    const = lambda shape: pl.BlockSpec(shape, lambda b, t: (0, 0))
    kernel = functools.partial(gpa_kernel, n=n, m=m, compute_dtype=cdt)

    out = pl.pallas_call(
        kernel,
        out_shape=jax.ShapeDtypeStruct((B, m, N), jnp.float32),
        grid_spec=pltpu.PrefetchScalarGridSpec(
            num_scalar_prefetch=0,
            grid=(B, T),
            in_specs=[
                pl.BlockSpec((1, c2, TQ), lambda b, t: (b, 0, t)),   # xQuery tile
                pl.BlockSpec((1, c, N), lambda b, t: (b, 0, 0)),     # xKeyValue (full, fetched once per b)
                const((n + 1 + m, c2)), const((n + 1 + m, 1)),       # wqs, bqs
                const((n + m + 1, c)), const((n + m + 1, 1)),        # wkv, bkv
            ],
            out_specs=pl.BlockSpec((1, m, TQ), lambda b, t: (b, 0, t)),
            scratch_shapes=[pltpu.VMEM((n + 1, N), jnp.float32),     # [K_scaled ; -ksq]
                            pltpu.VMEM((m + 1, N), cdt)],            # [wpa@V ; 1]
        ),
        # batch axis parallel (v7x: one batch element per TensorCore when B>=2);
        # query-tile axis carries the KV scratch -> arbitrary.
        compiler_params=pltpu.CompilerParams(
            dimension_semantics=("parallel", "arbitrary")),
    )(xq_f, xkv_f, wqs, bqs, wkv, bkv)

    return out.reshape(B, m, H, W)


def gpa_reference(x_kv, x_q, params):
    """Pure-JAX reference mirroring the PyTorch forward (fac <= 1 branch)."""
    B, c, H, W = x_kv.shape
    _, c2, _, _ = x_q.shape
    N = H * W
    n = params["wq"].shape[0]
    m = params["wv"].shape[0]

    xkv = x_kv.reshape(B, c, N)
    xq = x_q.reshape(B, c2, N)
    Q = jnp.einsum("oc,bcn->bon", params["wq"], xq) + params["bq"][None]
    K = jnp.einsum("oc,bcn->bon", params["wk"], xkv) + params["bk"][None]
    V = jnp.einsum("oc,bcn->bon", params["wv"], xkv) + params["bv"][None]

    s = jnp.float32(n) ** 0.25
    q = jnp.swapaxes(Q, 1, 2) / s          # (B, N, n)
    k = K / s                              # (B, n, N)
    energy = 2.0 * jnp.einsum("bid,bdj->bij", q, k)
    energy = energy - jnp.sum(q * q, axis=2, keepdims=True)
    energy = energy - jnp.sum(k * k, axis=1)[:, None, :]
    attn = jax.nn.softmax(energy - jnp.max(energy), axis=-1)
    att = jnp.einsum("bcj,bij->bci", V, attn)          # (B, m, N)

    cat = jnp.concatenate([xq, att], axis=1)
    proj = jnp.einsum("oc,bcn->bon", params["wp"], cat) + params["bp"][None]
    out = xq[:, :m] + proj
    return out.reshape(B, m, H, W)


def init_params(key, c, c2, m, n):
    ks = jax.random.split(key, 8)
    f32 = jnp.float32
    return {
        "wq": (0.2 * jax.random.normal(ks[0], (n, c2))).astype(f32),
        "bq": (0.05 * jax.random.normal(ks[1], (n, 1))).astype(f32),
        "wk": (0.2 * jax.random.normal(ks[2], (n, c))).astype(f32),
        "bk": (0.05 * jax.random.normal(ks[3], (n, 1))).astype(f32),
        "wv": (0.2 * jax.random.normal(ks[4], (m, c))).astype(f32),
        "bv": (0.05 * jax.random.normal(ks[5], (m, 1))).astype(f32),
        "wp": (0.2 * jax.random.normal(ks[6], (m, c2 + m))).astype(f32),
        "bp": (0.05 * jax.random.normal(ks[7], (m, 1))).astype(f32),
    }


if __name__ == "__main__":
    # Small shapes consistent with the module: B=2, c=c2=4, m=4, spatial 16x16
    # (=> fac = 16 // 64 = 0, dense-attention branch).
    B, c, c2, m = 2, 4, 4, 4
    n = max(c, c2)
    H = W = 16

    key = jax.random.PRNGKey(0)
    k_kv, k_q, k_p = jax.random.split(key, 3)
    x_kv = jax.random.normal(k_kv, (B, c, H, W), dtype=jnp.float32)
    x_q = jax.random.normal(k_q, (B, c2, H, W), dtype=jnp.float32)
    params = init_params(k_p, c, c2, m, n)

    out = jax.jit(gpa_forward)(x_kv, x_q, params)
    out = jax.block_until_ready(out)

    ref = gpa_reference(x_kv, x_q, params)
    assert out.shape == (B, m, H, W), out.shape
    # bf16 softmax tail / bf16 V matmul + approx reciprocal => slightly looser tol.
    assert jnp.allclose(out, ref, rtol=1e-2, atol=1e-2), float(jnp.max(jnp.abs(out - ref)))

    print("KERNEL_OK")
</pallas_src>

<mosaic_0001>
module attributes {stable_mosaic.version = 11 : i64} {
  func.func @gpa_kernel(%arg0: i32, %arg1: i32, %arg2: memref<1x4x256xf32, #tpu.memory_space<vmem>>, %arg3: memref<1x4x256xf32, #tpu.memory_space<vmem>>, %arg4: memref<9x4xf32, #tpu.memory_space<vmem>>, %arg5: memref<9x1xf32, #tpu.memory_space<vmem>>, %arg6: memref<9x4xf32, #tpu.memory_space<vmem>>, %arg7: memref<9x1xf32, #tpu.memory_space<vmem>>, %arg8: memref<1x4x256xf32, #tpu.memory_space<vmem>>, %arg9: memref<5x256xf32, #tpu.memory_space<vmem>>, %arg10: memref<5x256xbf16, #tpu.memory_space<vmem>>) attributes {dimension_semantics = [#tpu.dimension_semantics<parallel>, #tpu.dimension_semantics<arbitrary>], iteration_bounds = array<i64: 2, 1>, scalar_prefetch = 0 : i64, scratch_operands = 2 : i64, tpu.core_type = #tpu.core_type<tc>, window_params = [{transform_indices = @transform_0, window_bounds = array<i64: 1, 4, 256>}, {transform_indices = @transform_1, window_bounds = array<i64: 1, 4, 256>}, {pipeline_mode = #tpu.pipeline_mode<synchronous>, transform_indices = @transform_2, window_bounds = array<i64: 9, 4>}, {pipeline_mode = #tpu.pipeline_mode<synchronous>, transform_indices = @transform_3, window_bounds = array<i64: 9, 1>}, {pipeline_mode = #tpu.pipeline_mode<synchronous>, transform_indices = @transform_4, window_bounds = array<i64: 9, 4>}, {pipeline_mode = #tpu.pipeline_mode<synchronous>, transform_indices = @transform_5, window_bounds = array<i64: 9, 1>}, {transform_indices = @transform_6, window_bounds = array<i64: 1, 4, 256>}]} {
    %c0_i32 = arith.constant 0 : i32
    %0 = arith.cmpi eq, %arg1, %c0_i32 : i32
    %1 = arith.extui %0 : i1 to i32
    %c0_i32_0 = arith.constant 0 : i32
    %2 = arith.cmpi ne, %1, %c0_i32_0 : i32
    scf.if %2 {
      %c0_17 = arith.constant 0 : index
      %c0_18 = arith.constant 0 : index
      %c0_19 = arith.constant 0 : index
      %31 = vector.load %arg3[%c0_17, %c0_18, %c0_19] : memref<1x4x256xf32, #tpu.memory_space<vmem>>, vector<1x4x256xf32>
      %32 = vector.shape_cast %31 : vector<1x4x256xf32> to vector<4x256xf32>
      %c0_20 = arith.constant 0 : index
      %c0_21 = arith.constant 0 : index
      %33 = vector.load %arg6[%c0_20, %c0_21] : memref<9x4xf32, #tpu.memory_space<vmem>>, vector<9x4xf32>
      %cst_22 = arith.constant dense<0.000000e+00> : vector<9x256xf32>
      %34 = tpu.matmul %33, %32, %cst_22 {dimension_numbers = #tpu.dot_dimension_numbers<[1], [0], [0], [1], [0, 0, 1, 1], [], []>} : vector<9x4xf32>, vector<4x256xf32>, vector<9x256xf32> -> vector<9x256xf32>
      %c0_23 = arith.constant 0 : index
      %c0_24 = arith.constant 0 : index
      %35 = vector.load %arg7[%c0_23, %c0_24] : memref<9x1xf32, #tpu.memory_space<vmem>>, vector<9x1xf32>
      %36 = vector.broadcast %35 : vector<9x1xf32> to vector<9x256xf32>
      %37 = arith.addf %34, %36 : vector<9x256xf32>
      %38 = vector.extract_strided_slice %37 {offsets = [0, 0], sizes = [4, 256], strides = [1, 1]} : vector<9x256xf32> to vector<4x256xf32>
      %39 = arith.mulf %38, %38 : vector<4x256xf32>
      %cst_25 = arith.constant dense<0.000000e+00> : vector<256xf32>
      %40 = vector.multi_reduction <add>, %39, %cst_25 [0] : vector<4x256xf32> to vector<256xf32>
      %41 = vector.shape_cast %40 : vector<256xf32> to vector<1x256xf32>
      %cst_26 = arith.constant 5.000000e-01 : f32
      %42 = vector.broadcast %cst_26 : f32 to vector<1x256xf32>
      %43 = arith.mulf %42, %41 : vector<1x256xf32>
      %cst_27 = arith.constant 0.000000e+00 : f32
      %44 = vector.broadcast %cst_27 : f32 to vector<1x256xf32>
      %45 = arith.subf %44, %43 : vector<1x256xf32>
      %46 = tpu.concatenate %38, %45 in 0 : vector<4x256xf32>, vector<1x256xf32> -> vector<5x256xf32>
      %c0_28 = arith.constant 0 : index
      %c0_29 = arith.constant 0 : index
      %47 = vector.load %arg9[%c0_28, %c0_29] : memref<5x256xf32, #tpu.memory_space<vmem>>, vector<5x256xf32>
      tpu.vector_store %arg9[%c0_28, %c0_29], %46 {strides = array<i32>} : memref<5x256xf32, #tpu.memory_space<vmem>>, vector<5x256xf32>,
      %48 = vector.extract_strided_slice %37 {offsets = [4, 0], sizes = [5, 256], strides = [1, 1]} : vector<9x256xf32> to vector<5x256xf32>
      %49 = arith.truncf %48 : vector<5x256xf32> to vector<5x256xbf16>
      %c0_30 = arith.constant 0 : index
      %c0_31 = arith.constant 0 : index
      %50 = vector.load %arg10[%c0_30, %c0_31] : memref<5x256xbf16, #tpu.memory_space<vmem>>, vector<5x256xbf16>
      tpu.vector_store %arg10[%c0_30, %c0_31], %49 {strides = array<i32>} : memref<5x256xbf16, #tpu.memory_space<vmem>>, vector<5x256xbf16>,
    } else {
    }
    %c0 = arith.constant 0 : index
    %c0_1 = arith.constant 0 : index
    %c0_2 = arith.constant 0 : index
    %3 = vector.load %arg2[%c0, %c0_1, %c0_2] : memref<1x4x256xf32, #tpu.memory_space<vmem>>, vector<1x4x256xf32>
    %4 = vector.shape_cast %3 : vector<1x4x256xf32> to vector<4x256xf32>
    %c0_3 = arith.constant 0 : index
    %c0_4 = arith.constant 0 : index
    %5 = vector.load %arg4[%c0_3, %c0_4] : memref<9x4xf32, #tpu.memory_space<vmem>>, vector<9x4xf32>
    %cst = arith.constant dense<0.000000e+00> : vector<9x256xf32>
    %6 = tpu.matmul %5, %4, %cst {dimension_numbers = #tpu.dot_dimension_numbers<[1], [0], [0], [1], [0, 0, 1, 1], [], []>} : vector<9x4xf32>, vector<4x256xf32>, vector<9x256xf32> -> vector<9x256xf32>
    %c0_5 = arith.constant 0 : index
    %c0_6 = arith.constant 0 : index
    %7 = vector.load %arg5[%c0_5, %c0_6] : memref<9x1xf32, #tpu.memory_space<vmem>>, vector<9x1xf32>
    %8 = vector.broadcast %7 : vector<9x1xf32> to vector<9x256xf32>
    %9 = arith.addf %6, %8 : vector<9x256xf32>
    %10 = vector.extract_strided_slice %9 {offsets = [0, 0], sizes = [5, 256], strides = [1, 1]} : vector<9x256xf32> to vector<5x256xf32>
    %11 = vector.extract_strided_slice %9 {offsets = [5, 0], sizes = [4, 256], strides = [1, 1]} : vector<9x256xf32> to vector<4x256xf32>
    %c0_7 = arith.constant 0 : index
    %c0_8 = arith.constant 0 : index
    %12 = vector.load %arg9[%c0_7, %c0_8] : memref<5x256xf32, #tpu.memory_space<vmem>>, vector<5x256xf32>
    %cst_9 = arith.constant dense<0.000000e+00> : vector<256x256xf32>
    %13 = tpu.matmul %12, %10, %cst_9 {dimension_numbers = #tpu.dot_dimension_numbers<[0], [0], [1], [1], [0, 1, 1, 1], [], []>} : vector<5x256xf32>, vector<5x256xf32>, vector<256x256xf32> -> vector<256x256xf32>
    %cst_10 = arith.constant dense<0xFF800000> : vector<256xf32>
    %14 = vector.multi_reduction <maximumf>, %13, %cst_10 [0] : vector<256x256xf32> to vector<256xf32>
    %15 = vector.shape_cast %14 : vector<256xf32> to vector<1x256xf32>
    %16 = vector.broadcast %15 : vector<1x256xf32> to vector<256x256xf32>
    %17 = arith.subf %13, %16 : vector<256x256xf32>
    %18 = arith.truncf %17 : vector<256x256xf32> to vector<256x256xbf16>
    %19 = math.exp %18 : vector<256x256xbf16>
    %c0_11 = arith.constant 0 : index
    %c0_12 = arith.constant 0 : index
    %20 = vector.load %arg10[%c0_11, %c0_12] : memref<5x256xbf16, #tpu.memory_space<vmem>>, vector<5x256xbf16>
    %cst_13 = arith.constant dense<0.000000e+00> : vector<5x256xf32>
    %21 = tpu.matmul %20, %19, %cst_13 {dimension_numbers = #tpu.dot_dimension_numbers<[1], [0], [0], [1], [0, 0, 1, 1], [], []>} : vector<5x256xbf16>, vector<256x256xbf16>, vector<5x256xf32> -> vector<5x256xf32>
    %22 = vector.extract_strided_slice %21 {offsets = [0, 0], sizes = [4, 256], strides = [1, 1]} : vector<5x256xf32> to vector<4x256xf32>
    %23 = vector.extract_strided_slice %21 {offsets = [4, 0], sizes = [1, 256], strides = [1, 1]} : vector<5x256xf32> to vector<1x256xf32>
    %24 = tpu.reciprocal %23 {approx = true} : vector<1x256xf32> -> vector<1x256xf32>
    %25 = vector.broadcast %24 : vector<1x256xf32> to vector<4x256xf32>
    %26 = arith.mulf %22, %25 : vector<4x256xf32>
    %27 = arith.addf %11, %26 : vector<4x256xf32>
    %c0_14 = arith.constant 0 : index
    %c0_15 = arith.constant 0 : index
    %c0_16 = arith.constant 0 : index
    %28 = vector.load %arg8[%c0_14, %c0_15, %c0_16] : memref<1x4x256xf32, #tpu.memory_space<vmem>>, vector<1x4x256xf32>
    %29 = vector.shape_cast %28 : vector<1x4x256xf32> to vector<4x256xf32>
    %30 = vector.shape_cast %27 : vector<4x256xf32> to vector<1x4x256xf32>
    tpu.vector_store %arg8[%c0_14, %c0_15, %c0_16], %30 {strides = array<i32>} : memref<1x4x256xf32, #tpu.memory_space<vmem>>, vector<1x4x256xf32>,
    return
  }
  func.func @transform_0(%arg0: i32, %arg1: i32) -> (i32, i32, i32) {
    %c0_i32 = arith.constant 0 : i32
    %c0_i32_0 = arith.constant 0 : i32
    return %arg0, %c0_i32, %arg1 : i32, i32, i32
  }
  func.func @transform_1(%arg0: i32, %arg1: i32) -> (i32, i32, i32) {
    %c0_i32 = arith.constant 0 : i32
    %c0_i32_0 = arith.constant 0 : i32
    %c0_i32_1 = arith.constant 0 : i32
    return %arg0, %c0_i32, %c0_i32_0 : i32, i32, i32
  }
  func.func @transform_2(%arg0: i32, %arg1: i32) -> (i32, i32) {
    %c0_i32 = arith.constant 0 : i32
    %c0_i32_0 = arith.constant 0 : i32
    %c0_i32_1 = arith.constant 0 : i32
    return %c0_i32, %c0_i32_0 : i32, i32
  }
  func.func @transform_3(%arg0: i32, %arg1: i32) -> (i32, i32) {
    %c0_i32 = arith.constant 0 : i32
    %c0_i32_0 = arith.constant 0 : i32
    %c0_i32_1 = arith.constant 0 : i32
    return %c0_i32, %c0_i32_0 : i32, i32
  }
  func.func @transform_4(%arg0: i32, %arg1: i32) -> (i32, i32) {
    %c0_i32 = arith.constant 0 : i32
    %c0_i32_0 = arith.constant 0 : i32
    %c0_i32_1 = arith.constant 0 : i32
    return %c0_i32, %c0_i32_0 : i32, i32
  }
  func.func @transform_5(%arg0: i32, %arg1: i32) -> (i32, i32) {
    %c0_i32 = arith.constant 0 : i32
    %c0_i32_0 = arith.constant 0 : i32
    %c0_i32_1 = arith.constant 0 : i32
    return %c0_i32, %c0_i32_0 : i32, i32
  }
  func.func @transform_6(%arg0: i32, %arg1: i32) -> (i32, i32, i32) {
    %c0_i32 = arith.constant 0 : i32
    %c0_i32_0 = arith.constant 0 : i32
    return %arg0, %c0_i32, %arg1 : i32, i32, i32
  }
}

</mosaic_0001>

<llo_original>
// kernel: gpa_forward.1
$region0: #{gpa_forward.1}
  #allocation0 [shape = 'u32[]', space=smem, size = 0x4, offset = 0x4, fixed_abs, tag = 'smem constant byte address 0x4 - core index']
  #allocation1 [shape = 'u32[144,128]{1,0:T(1,128)}', space=vmem, size = 0x12000, scoped, tag = 'internal scratch']
  #allocation2 [shape = 'f32[5,256]{1,0:T(8,128)}', space=vmem, size = 0x2000, scoped, tag = 'scratch operand']
  #allocation3 [shape = 'bf16[5,256]{1,0:T(8,128)(2,1)}', space=vmem, size = 0x1000, scoped, tag = 'scratch operand']
  %s0 = inlined_call_operand.vmem [shape: f32[2,4,256], index: 0, kind: input, shape index: {}]
  %s1 = inlined_call_operand.vmem [shape: f32[2,4,256], index: 1, kind: input, shape index: {}]
  %s2 = inlined_call_operand.vmem [shape: f32[9,4], index: 2, kind: input, shape index: {}]
  %s3 = inlined_call_operand.vmem [shape: f32[9,1], index: 3, kind: input, shape index: {}]
  %s4 = inlined_call_operand.vmem [shape: f32[9,4], index: 4, kind: input, shape index: {}]
  %s5 = inlined_call_operand.vmem [shape: f32[9,1], index: 5, kind: input, shape index: {}]
  %s6 = inlined_call_operand.vmem [shape: f32[2,4,256], index: 6, kind: output, shape index: {}]
  %s7 = sld [smem:[#allocation0]]
  $region61: #{gpa_forward.1} parent=0
    _
  %s9 = ssub.s32 1, %s7
  %s10 = scalar_select 0, %s9, %s7
  loop: start=0, step=1, limit=4
  $region2: #{gpa_forward.1} parent=0 // loop_pre_header
    _
  $region3: #{gpa_forward.1} parent=0 // loop_header
    %s12 = sphi 0, %s16
    %p13 = scmp.ge.s32.totalorder %s12, 4
    %s19 = sphi 0, %s31
    %s20 = sphi 0, %s27
    %s21 = sphi 0, %s19
    %s22 = sphi 0, %s20
    %s23 = sphi 0, %s21
    %s24 = sphi 0, %s22
    %s36 = sphi 0, %s38
    %s39 = sphi 0, %s36
    %s40 = sphi 0, %s39
    %s56 = sphi 0, %s40
    %s62 = sphi 0, %s64
    %s65 = sphi 0, %s62
    %s66 = sphi 0, %s65
    %s82 = sphi 0, %s66
    %s86 = sphi 0, %s86
    %s88 = sphi 0, %s86
    %s89 = sphi 0, %s88
    %s103 = sphi 0, %s89
    %s107 = sphi 0, %s107
    %s109 = sphi 0, %s107
    %s110 = sphi 0, %s109
    %s124 = sphi 0, %s110
    %s128 = sphi 0, %s128
    %s130 = sphi 0, %s128
    %s131 = sphi 0, %s130
    %s145 = sphi 0, %s131
    %s149 = sphi 0, %s149
    %s151 = sphi 0, %s149
    %s152 = sphi 0, %s151
    %s166 = sphi 0, %s152
    %s174 = sphi 0, %s176
    %s177 = sphi 0, %s174
    %s178 = sphi 0, %s177
    %s194 = sphi 0, %s178
  $region4: #{gpa_forward.1} parent=0 // loop_header_branch
    %15 = sbr.rel (%p13) target = $region8
  $region5: #{gpa_forward.1} parent=0 // loop_body
    %s17 = ssub.s32 %s12, 1
    %s18 = ssub.s32 %s12, 2
    %s25 = sadd.s32 1, %s20
    %p26 = scmp.ge.s32.totalorder %s25, 1
    %s27 = scalar_select %p26, 0, %s25
    %s28 = sadd.s32 1, %s19
    %s29 = scalar_select %p26, %s28, %s19
    %p30 = scmp.ge.s32.totalorder %s29, 2
    %s31 = scalar_select %p30, 0, %s29
    %s32 = ssub.s32 %s19, %s31
    %s33 = ssub.s32 %s20, %s27
    %s34 = sor.u32 %s32, %s33
    %p35 = scmp.eq.s32.totalorder %s34, 0
    %s37 = sadd.s32 %s36, 1
    %s38 = scalar_select %p35, %s36, %s37
    %p41 = pneg %p35
    %p42 = scmp.eq.s32.totalorder %s12, 1
    %p43 = por %p41, %p42
    %p44 = scmp.ne.s32.totalorder %s36, %s39
    %p45 = scmp.eq.s32.totalorder %s12, 0
    %p46 = por %p44, %p45
    %p47 = scmp.ne.s32.totalorder %s36, %s39
    %p48 = scmp.eq.s32.totalorder %s17, 1
    %p49 = por %p47, %p48
    %p50 = scmp.ne.s32.totalorder %s39, %s40
    %p51 = scmp.eq.s32.totalorder %s17, 0
    %p52 = por %p50, %p51
    %p53 = scmp.ne.s32.totalorder %s39, %s40
    %p54 = scmp.eq.s32.totalorder %s18, 1
    %p55 = por %p53, %p54
    %p57 = scmp.ne.s32.totalorder %s40, %s56
    %p58 = scmp.eq.s32.totalorder %s18, 0
    %p59 = por %p57, %p58
    %s60 = ssub.s32 %s19, %s31
    %p61 = scmp.eq.s32.totalorder %s60, 0
    %s63 = sadd.s32 %s62, 1
    %s64 = scalar_select %p61, %s62, %s63
    %p67 = pneg %p61
    %p68 = scmp.eq.s32.totalorder %s12, 1
    %p69 = por %p67, %p68
    %p70 = scmp.ne.s32.totalorder %s62, %s65
    %p71 = scmp.eq.s32.totalorder %s12, 0
    %p72 = por %p70, %p71
    %p73 = scmp.ne.s32.totalorder %s62, %s65
    %p74 = scmp.eq.s32.totalorder %s17, 1
    %p75 = por %p73, %p74
    %p76 = scmp.ne.s32.totalorder %s65, %s66
    %p77 = scmp.eq.s32.totalorder %s17, 0
    %p78 = por %p76, %p77
    %p79 = scmp.ne.s32.totalorder %s65, %s66
    %p80 = scmp.eq.s32.totalorder %s18, 1
    %p81 = por %p79, %p80
    %p83 = scmp.ne.s32.totalorder %s66, %s82
    %p84 = scmp.eq.s32.totalorder %s18, 0
    %p85 = por %p83, %p84
    %s87 = sadd.s32 %s86, 1
    %p90 = scmp.eq.s32.totalorder %s12, 1
    %p91 = scmp.ne.s32.totalorder %s86, %s88
    %p92 = scmp.eq.s32.totalorder %s12, 0
    %p93 = por %p91, %p92
    %p94 = scmp.ne.s32.totalorder %s86, %s88
    %p95 = scmp.eq.s32.totalorder %s17, 1
    %p96 = por %p94, %p95
    %p97 = scmp.ne.s32.totalorder %s88, %s89
    %p98 = scmp.eq.s32.totalorder %s17, 0
    %p99 = por %p97, %p98
    %p100 = scmp.ne.s32.totalorder %s88, %s89
    %p101 = scmp.eq.s32.totalorder %s18, 1
    %p102 = por %p100, %p101
    %p104 = scmp.ne.s32.totalorder %s89, %s103
    %p105 = scmp.eq.s32.totalorder %s18, 0
    %p106 = por %p104, %p105
    %s108 = sadd.s32 %s107, 1
    %p111 = scmp.eq.s32.totalorder %s12, 1
    %p112 = scmp.ne.s32.totalorder %s107, %s109
    %p113 = scmp.eq.s32.totalorder %s12, 0
    %p114 = por %p112, %p113
    %p115 = scmp.ne.s32.totalorder %s107, %s109
    %p116 = scmp.eq.s32.totalorder %s17, 1
    %p117 = por %p115, %p116
    %p118 = scmp.ne.s32.totalorder %s109, %s110
    %p119 = scmp.eq.s32.totalorder %s17, 0
    %p120 = por %p118, %p119
    %p121 = scmp.ne.s32.totalorder %s109, %s110
    %p122 = scmp.eq.s32.totalorder %s18, 1
    %p123 = por %p121, %p122
    %p125 = scmp.ne.s32.totalorder %s110, %s124
    %p126 = scmp.eq.s32.totalorder %s18, 0
    %p127 = por %p125, %p126
    %s129 = sadd.s32 %s128, 1
    %p132 = scmp.eq.s32.totalorder %s12, 1
    %p133 = scmp.ne.s32.totalorder %s128, %s130
    %p134 = scmp.eq.s32.totalorder %s12, 0
    %p135 = por %p133, %p134
    %p136 = scmp.ne.s32.totalorder %s128, %s130
    %p137 = scmp.eq.s32.totalorder %s17, 1
    %p138 = por %p136, %p137
    %p139 = scmp.ne.s32.totalorder %s130, %s131
    %p140 = scmp.eq.s32.totalorder %s17, 0
    %p141 = por %p139, %p140
    %p142 = scmp.ne.s32.totalorder %s130, %s131
    %p143 = scmp.eq.s32.totalorder %s18, 1
    %p144 = por %p142, %p143
    %p146 = scmp.ne.s32.totalorder %s131, %s145
    %p147 = scmp.eq.s32.totalorder %s18, 0
    %p148 = por %p146, %p147
    %s150 = sadd.s32 %s149, 1
    %p153 = scmp.eq.s32.totalorder %s12, 1
    %p154 = scmp.ne.s32.totalorder %s149, %s151
    %p155 = scmp.eq.s32.totalorder %s12, 0
    %p156 = por %p154, %p155
    %p157 = scmp.ne.s32.totalorder %s149, %s151
    %p158 = scmp.eq.s32.totalorder %s17, 1
    %p159 = por %p157, %p158
    %p160 = scmp.ne.s32.totalorder %s151, %s152
    %p161 = scmp.eq.s32.totalorder %s17, 0
    %p162 = por %p160, %p161
    %p163 = scmp.ne.s32.totalorder %s151, %s152
    %p164 = scmp.eq.s32.totalorder %s18, 1
    %p165 = por %p163, %p164
    %p167 = scmp.ne.s32.totalorder %s152, %s166
    %p168 = scmp.eq.s32.totalorder %s18, 0
    %p169 = por %p167, %p168
    %s170 = ssub.s32 %s19, %s31
    %s171 = ssub.s32 %s20, %s27
    %s172 = sor.u32 %s170, %s171
    %p173 = scmp.eq.s32.totalorder %s172, 0
    %s175 = sadd.s32 %s174, 1
    %s176 = scalar_select %p173, %s174, %s175
    %p179 = pneg %p173
    %p180 = scmp.eq.s32.totalorder %s12, 1
    %p181 = por %p179, %p180
    %p182 = scmp.ne.s32.totalorder %s174, %s177
    %p183 = scmp.eq.s32.totalorder %s12, 0
    %p184 = por %p182, %p183
    %p185 = scmp.ne.s32.totalorder %s174, %s177
    %p186 = scmp.eq.s32.totalorder %s17, 1
    %p187 = por %p185, %p186
    %p188 = scmp.ne.s32.totalorder %s177, %s178
    %p189 = scmp.eq.s32.totalorder %s17, 0
    %p190 = por %p188, %p189
    %p191 = scmp.ne.s32.totalorder %s177, %s178
    %p192 = scmp.eq.s32.totalorder %s18, 1
    %p193 = por %p191, %p192
    %p195 = scmp.ne.s32.totalorder %s178, %s194
    %p196 = scmp.eq.s32.totalorder %s18, 0
    %p197 = por %p195, %p196
    %p198 = scmp.le.s32.totalorder 1, %s12
    %p199 = scmp.lt.s32.totalorder %s12, 3
    %p200 = pnand %p198, %p199
    %p201 = pneg %p200
    // Predicated region
    $region9: #{gpa_forward.1} parent=5 // pred_check
      _
    $region10: #{gpa_forward.1} parent=5 // pred_check_branch
      %203 = sbr.rel (%p200) target = $region12
    $region11: #{gpa_forward.1} parent=5 // pred_region
      %s204 = ssub.s32 %s12, 1
      // Predicated region
      $region13: #{gpa_forward.1} parent=11 // pred_check
        %p205 = pneg %p99
      $region14: #{gpa_forward.1} parent=11 // pred_check_branch
        %207 = sbr.rel (%p205) target = $region16
      $region15: #{gpa_forward.1} parent=11 // pred_region
        _
      $region16: #{gpa_forward.1} parent=11 // pred_fallthru
        _
      // Predicated region
      $region17: #{gpa_forward.1} parent=11 // pred_check
        %p208 = pneg %p120
      $region18: #{gpa_forward.1} parent=11 // pred_check_branch
        %210 = sbr.rel (%p208) target = $region20
      $region19: #{gpa_forward.1} parent=11 // pred_region
        _
      $region20: #{gpa_forward.1} parent=11 // pred_fallthru
        _
      // Predicated region
      $region21: #{gpa_forward.1} parent=11 // pred_check
        %p211 = pneg %p141
      $region22: #{gpa_forward.1} parent=11 // pred_check_branch
        %213 = sbr.rel (%p211) target = $region24
      $region23: #{gpa_forward.1} parent=11 // pred_region
        _
      $region24: #{gpa_forward.1} parent=11 // pred_fallthru
        _
      // Predicated region
      $region25: #{gpa_forward.1} parent=11 // pred_check
        %p214 = pneg %p162
      $region26: #{gpa_forward.1} parent=11 // pred_check_branch
        %216 = sbr.rel (%p214) target = $region28
      $region27: #{gpa_forward.1} parent=11 // pred_region
        _
      $region28: #{gpa_forward.1} parent=11 // pred_fallthru
        _
    $region12: #{gpa_forward.1} parent=5 // pred_fallthru
      _
    %p217 = scmp.lt.s32.totalorder %s12, 2
    // Predicated region
    $region29: #{gpa_forward.1} parent=5 // pred_check
      %p218 = pneg %p217
    $region30: #{gpa_forward.1} parent=5 // pred_check_branch
      %220 = sbr.rel (%p218) target = $region32
    $region31: #{gpa_forward.1} parent=5 // pred_region
      // Predicated region
      $region33: #{gpa_forward.1} parent=31 // pred_check
        %p221 = pneg %p46
      $region34: #{gpa_forward.1} parent=31 // pred_check_branch
        %223 = sbr.rel (%p221) target = $region36
      $region35: #{gpa_forward.1} parent=31 // pred_region
        %s224 = smul.u32 2, %s20
        %p225 = scmp.lt.s32.totalorder %s19, 1
        %s226 = scalar_select %p225, %s19, 1
        %p227 = scmp.lt.s32.totalorder %s224, 1
        %s228 = scalar_select %p227, %s224, 1
        %s229 = smul.addr %s226, 2
        %s230 = sadd.s32 %s228, %s229
        %s231 = smul.addr %s230, 4
        %s232 = scalar_lea.vmem %s0, %s231
        %s233 = smul.u32 2, %s20
      $region36: #{gpa_forward.1} parent=31 // pred_fallthru
        _
      // Predicated region
      $region37: #{gpa_forward.1} parent=31 // pred_check
        %p234 = pneg %p72
      $region38: #{gpa_forward.1} parent=31 // pred_check_branch
        %236 = sbr.rel (%p234) target = $region40
      $region39: #{gpa_forward.1} parent=31 // pred_region
        %p237 = scmp.lt.s32.totalorder %s19, 1
        %s238 = scalar_select %p237, %s19, 1
        %s239 = smul.addr %s238, 2
        %s240 = smul.addr %s239, 4
        %s241 = scalar_lea.vmem %s1, %s240
      $region40: #{gpa_forward.1} parent=31 // pred_fallthru
        _
    $region32: #{gpa_forward.1} parent=5 // pred_fallthru
      _
    %p242 = scmp.le.s32.totalorder 1, %s12
    %p243 = scmp.lt.s32.totalorder %s12, 3
    %p244 = pnand %p242, %p243
    %p245 = pneg %p244
    // Predicated region
    $region41: #{gpa_forward.1} parent=5 // pred_check
      _
    $region42: #{gpa_forward.1} parent=5 // pred_check_branch
      %247 = sbr.rel (%p244) target = $region44
    $region43: #{gpa_forward.1} parent=5 // pred_region
      %s248 = ssub.s32 %s12, 1
      %s249 = smul.u32 2, %s22
      %p250 = scmp.lt.s32.totalorder %s21, 1
      %s251 = scalar_select %p250, %s21, 1
      %p252 = scmp.lt.s32.totalorder %s249, 1
      %s253 = scalar_select %p252, %s249, 1
      %s254 = smul.addr %s251, 2
      %s255 = sadd.s32 %s253, %s254
      %s256 = smul.addr %s255, 4
      %s257 = scalar_lea.vmem %s0, %s256
      %p258 = pneg %p52
      %p259 = pneg %p49
      %p260 = scmp.lt.s32.totalorder %s21, 1
      %s261 = scalar_select %p260, %s21, 1
      %s262 = smul.addr %s261, 2
      %s263 = smul.addr %s262, 4
      %s264 = scalar_lea.vmem %s1, %s263
      %p265 = pneg %p78
      %p266 = pneg %p75
      %p267 = pneg %p99
      %p268 = pneg %p96
      %p269 = pneg %p120
      %p270 = pneg %p117
      %p271 = pneg %p141
      %p272 = pneg %p138
      %p273 = pneg %p162
      %p274 = pneg %p159
      %p275 = pneg %p190
      %p276 = pneg %p187
      %s277 = smul.u32 2, %s22
      %p278 = scmp.lt.s32.totalorder %s21, 1
      %s279 = scalar_select %p278, %s21, 1
      %p280 = scmp.lt.s32.totalorder %s277, 1
      %s281 = scalar_select %p280, %s277, 1
      %s282 = smul.addr %s279, 2
      %s283 = sadd.s32 %s281, %s282
      %s284 = smul.addr %s283, 4
      %s285 = scalar_lea.vmem %s6, %s284
      %s286 = smul.u32 2, %s22
      %p287 = scmp.lt.s32.totalorder %s21, 1
      %s288 = scalar_select %p287, %s21, 1
      %p289 = scmp.lt.s32.totalorder %s286, 1
      %s290 = scalar_select %p289, %s286, 1
      %s291 = smul.addr %s288, 2
      %s292 = sadd.s32 %s290, %s291
      %s293 = smul.addr %s292, 4
      %s294 = scalar_lea.vmem %s0, %s293
      %s295 = smul.u32 2, %s22
      %p296 = scmp.lt.s32.totalorder %s21, 1
      %s297 = scalar_select %p296, %s21, 1
      %s298 = smul.addr %s297, 2
      %s299 = smul.addr %s298, 4
      %s300 = scalar_lea.vmem %s1, %s299
      %s301 = smul.u32 2, %s22
      %p302 = scmp.lt.s32.totalorder %s21, 1
      %s303 = scalar_select %p302, %s21, 1
      %p304 = scmp.lt.s32.totalorder %s301, 1
      %s305 = scalar_select %p304, %s301, 1
      %s306 = smul.addr %s303, 2
      %s307 = sadd.s32 %s305, %s306
      %s308 = smul.addr %s307, 4
      %s309 = scalar_lea.vmem %s6, %s308
      %s310 = smul.u32 2, %s22
      %p311 = scmp.eq.s32.totalorder %s22, 0
      // Predicated region
      $region45: #{gpa_forward.1} parent=43 // pred_check
        %p312 = pneg %p311
      $region46: #{gpa_forward.1} parent=43 // pred_check_branch
        %314 = sbr.rel (%p312) target = $region48
      $region47: #{gpa_forward.1} parent=43 // pred_region
        %v315 = vld [vmem:[%s300] sm:$0xff]
        %v316 = vld [vmem:[%s4] sm:$0xff]
        %v317 = vld [vmem:[%s4 + $0x8] sm:$0x1]
        %v318 = vld [vmem:[%s5] sm:$0xff]
        %v319 = vld [vmem:[%s5 + $0x8] sm:$0x1]
        %321 = vset.pattern.permute.xlu0 0
        %322 = vperm.xlu0 %321, %v318
        %v323 = vpop.permute.xlu0 %322
        %326 = vset.pattern.permute.xlu0 0
        %327 = vperm.xlu0 %326, %v319
        %v328 = vpop.permute.xlu0 %327
        %v331 = vcombine.high %v315, %v315
        %vm332 = vcmask 31744
        %v334 = vsel %vm332, %v316, 0
        %v337 = vsel %vm332, %v317, 0
        %vm339 = vcmask 1043456
        %v340 = vsel %vm339, %v315, 0
        %v342 = vsel %vm339, %v331, 0
        %344 = vmatprep.subr.mxu0 %v342
        %345 = vmatpush1.msra.mxu0 %v340
        %346 = vmatprep.subr.mxu0 0.0
        %347 = vmatpush1.msra.mxu0 0.0
        %348 = vmatprep.subr.mxu0 0.0
        %349 = vmatpush1.msra.mxu0 0.0
        %350 = vmatprep.subr.mxu0 0.0
        %351 = vmatpush1.msra.mxu0 0.0
        %352 = vmatprep.subr.mxu0 0.0
        %353 = vmatpush1.msra.mxu0 0.0
        %354 = vmatprep.subr.mxu0 0.0
        %355 = vmatpush1.msra.mxu0 0.0
        %356 = vmatprep.subr.mxu0 0.0
        %357 = vmatpush1.msra.mxu0 0.0
        %358 = vmatprep.subr.mxu0 0.0
        %359 = vmatpush1.msra.mxu0 0.0
        %360 = vmatprep.subr.mxu0 0.0
        %361 = vmatpush1.msra.mxu0 0.0
        %362 = vmatprep.subr.mxu0 0.0
        %363 = vmatpush1.msra.mxu0 0.0
        %364 = vmatprep.subr.mxu0 0.0
        %365 = vmatpush1.msra.mxu0 0.0
        %366 = vmatprep.subr.mxu0 0.0
        %367 = vmatpush1.msra.mxu0 0.0
        %368 = vmatprep.subr.mxu0 0.0
        %369 = vmatpush1.msra.mxu0 0.0
        %370 = vmatprep.subr.mxu0 0.0
        %371 = vmatpush1.msra.mxu0 0.0
        %372 = vmatprep.subr.mxu0 0.0
        %373 = vmatpush1.msra.mxu0 0.0
        %374 = vmatprep.subr.mxu0 0.0
        %375 = vmatpush1.msra.mxu0 0.0
        %376 = vmatprep.subr.mxu0 0.0
        %377 = vmatpush1.msra.mxu0 0.0
        %378 = vmatprep.subr.mxu0 0.0
        %379 = vmatpush1.msra.mxu0 0.0
        %380 = vmatprep.subr.mxu0 0.0
        %381 = vmatpush1.msra.mxu0 0.0
        %382 = vmatprep.subr.mxu0 0.0
        %383 = vmatpush1.msra.mxu0 0.0
        %384 = vmatprep.subr.mxu0 0.0
        %385 = vmatpush1.msra.mxu0 0.0
        %386 = vmatprep.subr.mxu0 0.0
        %387 = vmatpush1.msra.mxu0 0.0
        %388 = vmatprep.subr.mxu0 0.0
        %389 = vmatpush1.msra.mxu0 0.0
        %390 = vmatprep.subr.mxu0 0.0
        %391 = vmatpush1.msra.mxu0 0.0
        %392 = vmatprep.subr.mxu0 0.0
        %393 = vmatpush1.msra.mxu0 0.0
        %394 = vmatprep.subr.mxu0 0.0
        %395 = vmatpush1.msra.mxu0 0.0
        %396 = vmatprep.subr.mxu0 0.0
        %397 = vmatpush1.msra.mxu0 0.0
        %398 = vmatprep.subr.mxu0 0.0
        %399 = vmatpush1.msra.mxu0 0.0
        %400 = vmatprep.subr.mxu0 0.0
        %401 = vmatpush1.msra.mxu0 0.0
        %402 = vmatprep.subr.mxu0 0.0
        %403 = vmatpush1.msra.mxu0 0.0
        %404 = vmatprep.subr.mxu0 0.0
        %405 = vmatpush1.msra.mxu0 0.0
        %406 = vmatprep.subr.mxu0 0.0
        %407 = vmatpush1.msra.mxu0 0.0
        %408 = vmatprep.mubr.f32.mxu0 0.0
        %409 = vmatmul.mubr.f32.gmra.mrb[0].mxu0 %v334
        %v410 = vpop.f32.mrb[0].mxu0
        %v411 = vadd.f32 %v323, %v410
        %v412 = vpop.f32.mrb[0].mxu0
        %v413 = vadd.f32 %v323, %v412
        %414 = vmatprep.mubr.f32.mxu0 0.0
        %415 = vmatmul.mubr.f32.gmra.mrb[0].mxu0 %v337
        %v416 = vpop.f32.mrb[0].mxu0
        %v417 = vadd.f32 %v328, %v416
        %v418 = vpop.f32.mrb[0].mxu0
        %v419 = vadd.f32 %v328, %v418
        %420 = vdwg.mxu0
        %v421 = vmul.f32 %v411, %v411
        %v422 = vmul.f32 %v413, %v413
        %v423 = vsel %vm339, %v421, 0.0
        %v424 = vrot.slane %v423, 4
        %v425 = vadd.f32 %v423, %v424
        %v426 = vrot.slane %v425, 2
        %v427 = vadd.f32 %v425, %v426
        %v428 = vrot.slane %v427, 1
        %v429 = vadd.f32 %v427, %v428
        %v430 = vsel %vm339, %v422, 0.0
        %v431 = vrot.slane %v430, 4
        %v432 = vadd.f32 %v430, %v431
        %v433 = vrot.slane %v432, 2
        %v434 = vadd.f32 %v432, %v433
        %v435 = vrot.slane %v434, 1
        %v436 = vadd.f32 %v434, %v435
        %v437 = vmul.f32 %v429, 0.5
        %v438 = vmul.f32 %v436, 0.5
        %v439 = vsub.f32 0.0, %v437
        %v440 = vsub.f32 0.0, %v438
        %v441 = vsel %vm339, %v411, %v439
        %v442 = vsel %vm339, %v413, %v440
        %443 = vst [vmem:[#allocation2] sm:$0x1f] %v441
        %444 = vst [vmem:[#allocation2 + $0x8] sm:$0x1f] %v442
        %v445 = vpack.c.bf16 %v417, %v411
        %v446 = vpack.c.bf16 %v419, %v413
        %v449 = vunpack.c.l.b16 %v445
        %v450 = vunpack.c.l.b16 %v446
        %v451 = vunpack.c.h.b16 %v445
        %v452 = vunpack.c.h.b16 %v446
        %v453 = vpack.c.b16 %v450, %v449
        %v454 = vpack.c.b16 %v452, %v451
        %vm455 = vcmask 1041408
        %vm456 = vcmask 1045508
        %vm457 = vmor %vm455, %vm456
        %v458 = vrot.slane %v453, 6
        %v459 = vrot.slane %v458, 4
        %v460 = vrot.slane %v454, 6
        %v461 = vsel %vm457, %v459, %v460
        %vm463 = vcmask 1042432
        %vm464 = vsmask.f32 2304
        %vm465 = vmand %vm463, %vm464
        %vm466 = vcmask 1046532
        %vm467 = vsmask.f32 6400
        %vm468 = vmand %vm466, %vm467
        %vm469 = vmor %vm468, %vm465
        %v470 = vld [vmem:[#allocation3] sm:$0x77]
        %v471 = vsel %vm469, %v461, %v470
        %472 = vst [vmem:[#allocation3] sm:$0x77] %v471
      $region48: #{gpa_forward.1} parent=43 // pred_fallthru
        _
      %v473 = vld [vmem:[%s294] sm:$0xff]
      %v474 = vld [vmem:[%s2] sm:$0xff]
      %v475 = vld [vmem:[%s2 + $0x8] sm:$0x1]
      %v476 = vld [vmem:[%s3] sm:$0xff]
      %v477 = vld [vmem:[%s3 + $0x8] sm:$0x1]
      %479 = vset.pattern.permute.xlu0 0
      %480 = vperm.xlu0 %479, %v476
      %v481 = vpop.permute.xlu0 %480
      %484 = vset.pattern.permute.xlu0 0
      %485 = vperm.xlu0 %484, %v477
      %v486 = vpop.permute.xlu0 %485
      %v489 = vcombine.high %v473, %v473
      %vm490 = vcmask 31744
      %v492 = vsel %vm490, %v474, 0
      %v495 = vsel %vm490, %v475, 0
      %vm497 = vcmask 1043456
      %v498 = vsel %vm497, %v473, 0
      %v500 = vsel %vm497, %v489, 0
      %502 = vmatprep.subr.mxu0 %v500
      %503 = vmatpush1.msra.mxu0 %v498
      %504 = vmatprep.subr.mxu0 0.0
      %505 = vmatpush1.msra.mxu0 0.0
      %506 = vmatprep.subr.mxu0 0.0
      %507 = vmatpush1.msra.mxu0 0.0
      %508 = vmatprep.subr.mxu0 0.0
      %509 = vmatpush1.msra.mxu0 0.0
      %510 = vmatprep.subr.mxu0 0.0
      %511 = vmatpush1.msra.mxu0 0.0
      %512 = vmatprep.subr.mxu0 0.0
      %513 = vmatpush1.msra.mxu0 0.0
      %514 = vmatprep.subr.mxu0 0.0
      %515 = vmatpush1.msra.mxu0 0.0
      %516 = vmatprep.subr.mxu0 0.0
      %517 = vmatpush1.msra.mxu0 0.0
      %518 = vmatprep.subr.mxu0 0.0
      %519 = vmatpush1.msra.mxu0 0.0
      %520 = vmatprep.subr.mxu0 0.0
      %521 = vmatpush1.msra.mxu0 0.0
      %522 = vmatprep.subr.mxu0 0.0
      %523 = vmatpush1.msra.mxu0 0.0
      %524 = vmatprep.subr.mxu0 0.0
      %525 = vmatpush1.msra.mxu0 0.0
      %526 = vmatprep.subr.mxu0 0.0
      %527 = vmatpush1.msra.mxu0 0.0
      %528 = vmatprep.subr.mxu0 0.0
      %529 = vmatpush1.msra.mxu0 0.0
      %530 = vmatprep.subr.mxu0 0.0
      %531 = vmatpush1.msra.mxu0 0.0
      %532 = vmatprep.subr.mxu0 0.0
      %533 = vmatpush1.msra.mxu0 0.0
      %534 = vmatprep.subr.mxu0 0.0
      %535 = vmatpush1.msra.mxu0 0.0
      %536 = vmatprep.subr.mxu0 0.0
      %537 = vmatpush1.msra.mxu0 0.0
      %538 = vmatprep.subr.mxu0 0.0
      %539 = vmatpush1.msra.mxu0 0.0
      %540 = vmatprep.subr.mxu0 0.0
      %541 = vmatpush1.msra.mxu0 0.0
      %542 = vmatprep.subr.mxu0 0.0
      %543 = vmatpush1.msra.mxu0 0.0
      %544 = vmatprep.subr.mxu0 0.0
      %545 = vmatpush1.msra.mxu0 0.0
      %546 = vmatprep.subr.mxu0 0.0
      %547 = vmatpush1.msra.mxu0 0.0
      %548 = vmatprep.subr.mxu0 0.0
      %549 = vmatpush1.msra.mxu0 0.0
      %550 = vmatprep.subr.mxu0 0.0
      %551 = vmatpush1.msra.mxu0 0.0
      %552 = vmatprep.subr.mxu0 0.0
      %553 = vmatpush1.msra.mxu0 0.0
      %554 = vmatprep.subr.mxu0 0.0
      %555 = vmatpush1.msra.mxu0 0.0
      %556 = vmatprep.subr.mxu0 0.0
      %557 = vmatpush1.msra.mxu0 0.0
      %558 = vmatprep.subr.mxu0 0.0
      %559 = vmatpush1.msra.mxu0 0.0
      %560 = vmatprep.subr.mxu0 0.0
      %561 = vmatpush1.msra.mxu0 0.0
      %562 = vmatprep.subr.mxu0 0.0
      %563 = vmatpush1.msra.mxu0 0.0
      %564 = vmatprep.subr.mxu0 0.0
      %565 = vmatpush1.msra.mxu0 0.0
      %566 = vmatprep.mubr.f32.mxu0 0.0
      %567 = vmatmul.mubr.f32.gmra.mrb[0].mxu0 %v492
      %v568 = vpop.f32.mrb[0].mxu0
      %v569 = vadd.f32 %v481, %v568
      %v570 = vpop.f32.mrb[0].mxu0
      %v571 = vadd.f32 %v481, %v570
      %572 = vmatprep.mubr.f32.mxu0 0.0
      %573 = vmatmul.mubr.f32.gmra.mrb[0].mxu0 %v495
      %v574 = vpop.f32.mrb[0].mxu0
      %v575 = vadd.f32 %v486, %v574
      %v576 = vpop.f32.mrb[0].mxu0
      %v577 = vadd.f32 %v486, %v576
      %578 = vdwg.mxu0
      %v579 = vld [vmem:[#allocation2] sm:$0x1f]
      %v580 = vld [vmem:[#allocation2 + $0x8] sm:$0x1f]
      %581 = vxpose.xlu0.b32.start [1/16] %v579, 128
      %582 = vxpose.xlu0.b32.cont [2/16] 0.0, 128
      %583 = vxpose.xlu0.b32.cont [3/16] 0.0, 128
      %584 = vxpose.xlu0.b32.cont [4/16] 0.0, 128
      %585 = vxpose.xlu0.b32.cont [5/16] 0.0, 128
      %586 = vxpose.xlu0.b32.cont [6/16] 0.0, 128
      %587 = vxpose.xlu0.b32.cont [7/16] 0.0, 128
      %588 = vxpose.xlu0.b32.cont [8/16] 0.0, 128
      %589 = vxpose.xlu0.b32.cont [9/16] 0.0, 128
      %590 = vxpose.xlu0.b32.cont [10/16] 0.0, 128
      %591 = vxpose.xlu0.b32.cont [11/16] 0.0, 128
      %592 = vxpose.xlu0.b32.cont [12/16] 0.0, 128
      %593 = vxpose.xlu0.b32.cont [13/16] 0.0, 128
      %594 = vxpose.xlu0.b32.cont [14/16] 0.0, 128
      %595 = vxpose.xlu0.b32.cont [15/16] 0.0, 128
      %596 = vxpose.xlu0.b32.end [16/16] 0.0, 128
      %v597 = vpop.trf.xlu0
      %v598 = vpop.trf.xlu0
      %v599 = vpop.trf.xlu0
      %v600 = vpop.trf.xlu0
      %v601 = vpop.trf.xlu0
      %v602 = vpop.trf.xlu0
      %v603 = vpop.trf.xlu0
      %v604 = vpop.trf.xlu0
      %v605 = vpop.trf.xlu0
      %v606 = vpop.trf.xlu0
      %v607 = vpop.trf.xlu0
      %v608 = vpop.trf.xlu0
      %v609 = vpop.trf.xlu0
      %v610 = vpop.trf.xlu0
      %v611 = vpop.trf.xlu0
      %v612 = vpop.trf.xlu0
      %613 = vxpose.xlu0.b32.start [1/16] %v580, 128
      %614 = vxpose.xlu0.b32.cont [2/16] 0.0, 128
      %615 = vxpose.xlu0.b32.cont [3/16] 0.0, 128
      %616 = vxpose.xlu0.b32.cont [4/16] 0.0, 128
      %617 = vxpose.xlu0.b32.cont [5/16] 0.0, 128
      %618 = vxpose.xlu0.b32.cont [6/16] 0.0, 128
      %619 = vxpose.xlu0.b32.cont [7/16] 0.0, 128
      %620 = vxpose.xlu0.b32.cont [8/16] 0.0, 128
      %621 = vxpose.xlu0.b32.cont [9/16] 0.0, 128
      %622 = vxpose.xlu0.b32.cont [10/16] 0.0, 128
      %623 = vxpose.xlu0.b32.cont [11/16] 0.0, 128
      %624 = vxpose.xlu0.b32.cont [12/16] 0.0, 128
      %625 = vxpose.xlu0.b32.cont [13/16] 0.0, 128
      %626 = vxpose.xlu0.b32.cont [14/16] 0.0, 128
      %627 = vxpose.xlu0.b32.cont [15/16] 0.0, 128
      %628 = vxpose.xlu0.b32.end [16/16] 0.0, 128
      %v629 = vpop.trf.xlu0
      %v630 = vpop.trf.xlu0
      %v631 = vpop.trf.xlu0
      %v632 = vpop.trf.xlu0
      %v633 = vpop.trf.xlu0
      %v634 = vpop.trf.xlu0
      %v635 = vpop.trf.xlu0
      %v636 = vpop.trf.xlu0
      %v637 = vpop.trf.xlu0
      %v638 = vpop.trf.xlu0
      %v639 = vpop.trf.xlu0
      %v640 = vpop.trf.xlu0
      %v641 = vpop.trf.xlu0
      %v642 = vpop.trf.xlu0
      %v643 = vpop.trf.xlu0
      %v644 = vpop.trf.xlu0
      %vm645 = vcmask 39936
      %v647 = vsel %vm645, %v597, 0
      %v650 = vsel %vm645, %v598, 0
      %v653 = vsel %vm645, %v599, 0
      %v656 = vsel %vm645, %v600, 0
      %v659 = vsel %vm645, %v601, 0
      %v662 = vsel %vm645, %v602, 0
      %v665 = vsel %vm645, %v603, 0
      %v668 = vsel %vm645, %v604, 0
      %v671 = vsel %vm645, %v605, 0
      %v674 = vsel %vm645, %v606, 0
      %v677 = vsel %vm645, %v607, 0
      %v680 = vsel %vm645, %v608, 0
      %v683 = vsel %vm645, %v609, 0
      %v686 = vsel %vm645, %v610, 0
      %v689 = vsel %vm645, %v611, 0
      %v692 = vsel %vm645, %v612, 0
      %v695 = vsel %vm645, %v629, 0
      %v698 = vsel %vm645, %v630, 0
      %v701 = vsel %vm645, %v631, 0
      %v704 = vsel %vm645, %v632, 0
      %v707 = vsel %vm645, %v633, 0
      %v710 = vsel %vm645, %v634, 0
      %v713 = vsel %vm645, %v635, 0
      %v716 = vsel %vm645, %v636, 0
      %v719 = vsel %vm645, %v637, 0
      %v722 = vsel %vm645, %v638, 0
      %v725 = vsel %vm645, %v639, 0
      %v728 = vsel %vm645, %v640, 0
      %v731 = vsel %vm645, %v641, 0
      %v734 = vsel %vm645, %v642, 0
      %v737 = vsel %vm645, %v643, 0
      %v740 = vsel %vm645, %v644, 0
      %vm742 = vcmask 1044480
      %v744 = vsel %vm742, %v569, 0
      %v747 = vsel %vm742, %v571, 0
      %749 = vmatprep.subr.mxu0 %v747
      %750 = vmatpush1.msra.mxu0 %v744
      %751 = vmatprep.subr.mxu0 0.0
      %752 = vmatpush1.msra.mxu0 0.0
      %753 = vmatprep.subr.mxu0 0.0
      %754 = vmatpush1.msra.mxu0 0.0
      %755 = vmatprep.subr.mxu0 0.0
      %756 = vmatpush1.msra.mxu0 0.0
      %757 = vmatprep.subr.mxu0 0.0
      %758 = vmatpush1.msra.mxu0 0.0
      %759 = vmatprep.subr.mxu0 0.0
      %760 = vmatpush1.msra.mxu0 0.0
      %761 = vmatprep.subr.mxu0 0.0
      %762 = vmatpush1.msra.mxu0 0.0
      %763 = vmatprep.subr.mxu0 0.0
      %764 = vmatpush1.msra.mxu0 0.0
      %765 = vmatprep.subr.mxu0 0.0
      %766 = vmatpush1.msra.mxu0 0.0
      %767 = vmatprep.subr.mxu0 0.0
      %768 = vmatpush1.msra.mxu0 0.0
      %769 = vmatprep.subr.mxu0 0.0
      %770 = vmatpush1.msra.mxu0 0.0
      %771 = vmatprep.subr.mxu0 0.0
      %772 = vmatpush1.msra.mxu0 0.0
      %773 = vmatprep.subr.mxu0 0.0
      %774 = vmatpush1.msra.mxu0 0.0
      %775 = vmatprep.subr.mxu0 0.0
      %776 = vmatpush1.msra.mxu0 0.0
      %777 = vmatprep.subr.mxu0 0.0
      %778 = vmatpush1.msra.mxu0 0.0
      %779 = vmatprep.subr.mxu0 0.0
      %780 = vmatpush1.msra.mxu0 0.0
      %781 = vmatprep.subr.mxu0 0.0
      %782 = vmatpush1.msra.mxu0 0.0
      %783 = vmatprep.subr.mxu0 0.0
      %784 = vmatpush1.msra.mxu0 0.0
      %785 = vmatprep.subr.mxu0 0.0
      %786 = vmatpush1.msra.mxu0 0.0
      %787 = vmatprep.subr.mxu0 0.0
      %788 = vmatpush1.msra.mxu0 0.0
      %789 = vmatprep.subr.mxu0 0.0
      %790 = vmatpush1.msra.mxu0 0.0
      %791 = vmatprep.subr.mxu0 0.0
      %792 = vmatpush1.msra.mxu0 0.0
      %793 = vmatprep.subr.mxu0 0.0
      %794 = vmatpush1.msra.mxu0 0.0
      %795 = vmatprep.subr.mxu0 0.0
      %796 = vmatpush1.msra.mxu0 0.0
      %797 = vmatprep.subr.mxu0 0.0
      %798 = vmatpush1.msra.mxu0 0.0
      %799 = vmatprep.subr.mxu0 0.0
      %800 = vmatpush1.msra.mxu0 0.0
      %801 = vmatprep.subr.mxu0 0.0
      %802 = vmatpush1.msra.mxu0 0.0
      %803 = vmatprep.subr.mxu0 0.0
      %804 = vmatpush1.msra.mxu0 0.0
      %805 = vmatprep.subr.mxu0 0.0
      %806 = vmatpush1.msra.mxu0 0.0
      %807 = vmatprep.subr.mxu0 0.0
      %808 = vmatpush1.msra.mxu0 0.0
      %809 = vmatprep.subr.mxu0 0.0
      %810 = vmatpush1.msra.mxu0 0.0
      %811 = vmatprep.subr.mxu0 0.0
      %812 = vmatpush1.msra.mxu0 0.0
      %813 = vmatprep.mubr.f32.mxu0 0.0
      %814 = vmatmul.mubr.f32.gmra.mrb[0].mxu0 %v647
      %v815 = vpop.f32.mrb[0].mxu0
      %v816 = vadd.f32 0.0, %v815
      %v817 = vpop.f32.mrb[0].mxu0
      %v818 = vadd.f32 0.0, %v817
      %819 = vmatprep.mubr.f32.mxu0 0.0
      %820 = vmatmul.mubr.f32.gmra.mrb[0].mxu0 %v650
      %v821 = vpop.f32.mrb[0].mxu0
      %v822 = vadd.f32 0.0, %v821
      %v823 = vpop.f32.mrb[0].mxu0
      %v824 = vadd.f32 0.0, %v823
      %825 = vmatprep.mubr.f32.mxu0 0.0
      %826 = vmatmul.mubr.f32.gmra.mrb[0].mxu0 %v653
      %v827 = vpop.f32.mrb[0].mxu0
      %v828 = vadd.f32 0.0, %v827
      %v829 = vpop.f32.mrb[0].mxu0
      %v830 = vadd.f32 0.0, %v829
      %831 = vmatprep.mubr.f32.mxu0 0.0
      %832 = vmatmul.mubr.f32.gmra.mrb[0].mxu0 %v656
      %v833 = vpop.f32.mrb[0].mxu0
      %v834 = vadd.f32 0.0, %v833
      %v835 = vpop.f32.mrb[0].mxu0
      %v836 = vadd.f32 0.0, %v835
      %837 = vmatprep.mubr.f32.mxu0 0.0
      %838 = vmatmul.mubr.f32.gmra.mrb[0].mxu0 %v659
      %v839 = vpop.f32.mrb[0].mxu0
      %v840 = vadd.f32 0.0, %v839
      %v841 = vpop.f32.mrb[0].mxu0
      %v842 = vadd.f32 0.0, %v841
      %843 = vmatprep.mubr.f32.mxu0 0.0
      %844 = vmatmul.mubr.f32.gmra.mrb[0].mxu0 %v662
      %v845 = vpop.f32.mrb[0].mxu0
      %v846 = vadd.f32 0.0, %v845
      %v847 = vpop.f32.mrb[0].mxu0
      %v848 = vadd.f32 0.0, %v847
      %849 = vmatprep.mubr.f32.mxu0 0.0
      %850 = vmatmul.mubr.f32.gmra.mrb[0].mxu0 %v665
      %v851 = vpop.f32.mrb[0].mxu0
      %v852 = vadd.f32 0.0, %v851
      %v853 = vpop.f32.mrb[0].mxu0
      %v854 = vadd.f32 0.0, %v853
      %855 = vmatprep.mubr.f32.mxu0 0.0
      %856 = vmatmul.mubr.f32.gmra.mrb[0].mxu0 %v668
      %v857 = vpop.f32.mrb[0].mxu0
      %v858 = vadd.f32 0.0, %v857
      %v859 = vpop.f32.mrb[0].mxu0
      %v860 = vadd.f32 0.0, %v859
      %861 = vmatprep.mubr.f32.mxu0 0.0
      %862 = vmatmul.mubr.f32.gmra.mrb[0].mxu0 %v671
      %v863 = vpop.f32.mrb[0].mxu0
      %v864 = vadd.f32 0.0, %v863
      %v865 = vpop.f32.mrb[0].mxu0
      %v866 = vadd.f32 0.0, %v865
      %867 = vmatprep.mubr.f32.mxu0 0.0
      %868 = vmatmul.mubr.f32.gmra.mrb[0].mxu0 %v674
      %v869 = vpop.f32.mrb[0].mxu0
      %v870 = vadd.f32 0.0, %v869
      %v871 = vpop.f32.mrb[0].mxu0
      %v872 = vadd.f32 0.0, %v871
      %873 = vmatprep.mubr.f32.mxu0 0.0
      %874 = vmatmul.mubr.f32.gmra.mrb[0].mxu0 %v677
      %v875 = vpop.f32.mrb[0].mxu0
      %v876 = vadd.f32 0.0, %v875
      %v877 = vpop.f32.mrb[0].mxu0
      %v878 = vadd.f32 0.0, %v877
      %879 = vmatprep.mubr.f32.mxu0 0.0
      %880 = vmatmul.mubr.f32.gmra.mrb[0].mxu0 %v680
      %v881 = vpop.f32.mrb[0].mxu0
      %v882 = vadd.f32 0.0, %v881
      %v883 = vpop.f32.mrb[0].mxu0
      %v884 = vadd.f32 0.0, %v883
      %885 = vmatprep.mubr.f32.mxu0 0.0
      %886 = vmatmul.mubr.f32.gmra.mrb[0].mxu0 %v683
      %v887 = vpop.f32.mrb[0].mxu0
      %v888 = vadd.f32 0.0, %v887
      %v889 = vpop.f32.mrb[0].mxu0
      %v890 = vadd.f32 0.0, %v889
      %891 = vmatprep.mubr.f32.mxu0 0.0
      %892 = vmatmul.mubr.f32.gmra.mrb[0].mxu0 %v686
      %v893 = vpop.f32.mrb[0].mxu0
      %v894 = vadd.f32 0.0, %v893
      %v895 = vpop.f32.mrb[0].mxu0
      %v896 = vadd.f32 0.0, %v895
      %897 = vmatprep.mubr.f32.mxu0 0.0
      %898 = vmatmul.mubr.f32.gmra.mrb[0].mxu0 %v689
      %v899 = vpop.f32.mrb[0].mxu0
      %v900 = vadd.f32 0.0, %v899
      %v901 = vpop.f32.mrb[0].mxu0
      %v902 = vadd.f32 0.0, %v901
      %903 = vmatprep.mubr.f32.mxu0 0.0
      %904 = vmatmul.mubr.f32.gmra.mrb[0].mxu0 %v692
      %v905 = vpop.f32.mrb[0].mxu0
      %v906 = vadd.f32 0.0, %v905
      %v907 = vpop.f32.mrb[0].mxu0
      %v908 = vadd.f32 0.0, %v907
      %909 = vmatprep.mubr.f32.mxu0 0.0
      %910 = vmatmul.mubr.f32.gmra.mrb[0].mxu0 %v695
      %v911 = vpop.f32.mrb[0].mxu0
      %v912 = vadd.f32 0.0, %v911
      %v913 = vpop.f32.mrb[0].mxu0
      %v914 = vadd.f32 0.0, %v913
      %915 = vmatprep.mubr.f32.mxu0 0.0
      %916 = vmatmul.mubr.f32.gmra.mrb[0].mxu0 %v698
      %v917 = vpop.f32.mrb[0].mxu0
      %v918 = vadd.f32 0.0, %v917
      %v919 = vpop.f32.mrb[0].mxu0
      %v920 = vadd.f32 0.0, %v919
      %921 = vmatprep.mubr.f32.mxu0 0.0
      %922 = vmatmul.mubr.f32.gmra.mrb[0].mxu0 %v701
      %v923 = vpop.f32.mrb[0].mxu0
      %v924 = vadd.f32 0.0, %v923
      %v925 = vpop.f32.mrb[0].mxu0
      %v926 = vadd.f32 0.0, %v925
      %927 = vmatprep.mubr.f32.mxu0 0.0
      %928 = vmatmul.mubr.f32.gmra.mrb[0].mxu0 %v704
      %v929 = vpop.f32.mrb[0].mxu0
      %v930 = vadd.f32 0.0, %v929
      %v931 = vpop.f32.mrb[0].mxu0
      %v932 = vadd.f32 0.0, %v931
      %933 = vmatprep.mubr.f32.mxu0 0.0
      %934 = vmatmul.mubr.f32.gmra.mrb[0].mxu0 %v707
      %v935 = vpop.f32.mrb[0].mxu0
      %v936 = vadd.f32 0.0, %v935
      %v937 = vpop.f32.mrb[0].mxu0
      %v938 = vadd.f32 0.0, %v937
      %939 = vmatprep.mubr.f32.mxu0 0.0
      %940 = vmatmul.mubr.f32.gmra.mrb[0].mxu0 %v710
      %v941 = vpop.f32.mrb[0].mxu0
      %v942 = vadd.f32 0.0, %v941
      %v943 = vpop.f32.mrb[0].mxu0
      %v944 = vadd.f32 0.0, %v943
      %945 = vmatprep.mubr.f32.mxu0 0.0
      %946 = vmatmul.mubr.f32.gmra.mrb[0].mxu0 %v713
      %v947 = vpop.f32.mrb[0].mxu0
      %v948 = vadd.f32 0.0, %v947
      %v949 = vpop.f32.mrb[0].mxu0
      %v950 = vadd.f32 0.0, %v949
      %951 = vmatprep.mubr.f32.mxu0 0.0
      %952 = vmatmul.mubr.f32.gmra.mrb[0].mxu0 %v716
      %v953 = vpop.f32.mrb[0].mxu0
      %v954 = vadd.f32 0.0, %v953
      %v955 = vpop.f32.mrb[0].mxu0
      %v956 = vadd.f32 0.0, %v955
      %957 = vmatprep.mubr.f32.mxu0 0.0
      %958 = vmatmul.mubr.f32.gmra.mrb[0].mxu0 %v719
      %v959 = vpop.f32.mrb[0].mxu0
      %v960 = vadd.f32 0.0, %v959
      %v961 = vpop.f32.mrb[0].mxu0
      %v962 = vadd.f32 0.0, %v961
      %963 = vmatprep.mubr.f32.mxu0 0.0
      %964 = vmatmul.mubr.f32.gmra.mrb[0].mxu0 %v722
      %v965 = vpop.f32.mrb[0].mxu0
      %v966 = vadd.f32 0.0, %v965
      %v967 = vpop.f32.mrb[0].mxu0
      %v968 = vadd.f32 0.0, %v967
      %969 = vmatprep.mubr.f32.mxu0 0.0
      %970 = vmatmul.mubr.f32.gmra.mrb[0].mxu0 %v725
      %v971 = vpop.f32.mrb[0].mxu0
      %v972 = vadd.f32 0.0, %v971
      %v973 = vpop.f32.mrb[0].mxu0
      %v974 = vadd.f32 0.0, %v973
      %975 = vmatprep.mubr.f32.mxu0 0.0
      %976 = vmatmul.mubr.f32.gmra.mrb[0].mxu0 %v728
      %v977 = vpop.f32.mrb[0].mxu0
      %v978 = vadd.f32 0.0, %v977
      %v979 = vpop.f32.mrb[0].mxu0
      %v980 = vadd.f32 0.0, %v979
      %981 = vmatprep.mubr.f32.mxu0 0.0
      %982 = vmatmul.mubr.f32.gmra.mrb[0].mxu0 %v731
      %v983 = vpop.f32.mrb[0].mxu0
      %v984 = vadd.f32 0.0, %v983
      %v985 = vpop.f32.mrb[0].mxu0
      %v986 = vadd.f32 0.0, %v985
      %987 = vmatprep.mubr.f32.mxu0 0.0
      %988 = vmatmul.mubr.f32.gmra.mrb[0].mxu0 %v734
      %v989 = vpop.f32.mrb[0].mxu0
      %v990 = vadd.f32 0.0, %v989
      %v991 = vpop.f32.mrb[0].mxu0
      %v992 = vadd.f32 0.0, %v991
      %993 = vmatprep.mubr.f32.mxu0 0.0
      %994 = vmatmul.mubr.f32.gmra.mrb[0].mxu0 %v737
      %v995 = vpop.f32.mrb[0].mxu0
      %v996 = vadd.f32 0.0, %v995
      %v997 = vpop.f32.mrb[0].mxu0
      %v998 = vadd.f32 0.0, %v997
      %999 = vmatprep.mubr.f32.mxu0 0.0
      %1000 = vmatmul.mubr.f32.gmra.mrb[0].mxu0 %v740
      %v1001 = vpop.f32.mrb[0].mxu0
      %v1002 = vadd.f32 0.0, %v1001
      %v1003 = vpop.f32.mrb[0].mxu0
      %v1004 = vadd.f32 0.0, %v1003
      %1005 = vdwg.mxu0
      %v1006 = vmax.f32 %v816, %v828
      %v1007 = vmax.f32 %v822, %v834
      %v1008 = vmax.f32 %v1006, %v840
      %v1009 = vmax.f32 %v1007, %v846
      %v1010 = vmax.f32 %v1008, %v852
      %v1011 = vmax.f32 %v1009, %v858
      %v1012 = vmax.f32 %v1010, %v864
      %v1013 = vmax.f32 %v1011, %v870
      %v1014 = vmax.f32 %v1012, %v876
      %v1015 = vmax.f32 %v1013, %v882
      %v1016 = vmax.f32 %v1014, %v888
      %v1017 = vmax.f32 %v1015, %v894
      %v1018 = vmax.f32 %v1016, %v900
      %v1019 = vmax.f32 %v1017, %v906
      %v1020 = vmax.f32 %v1018, %v912
      %v1021 = vmax.f32 %v1019, %v918
      %v1022 = vmax.f32 %v1020, %v924
      %v1023 = vmax.f32 %v1021, %v930
      %v1024 = vmax.f32 %v1022, %v936
      %v1025 = vmax.f32 %v1023, %v942
      %v1026 = vmax.f32 %v1024, %v948
      %v1027 = vmax.f32 %v1025, %v954
      %v1028 = vmax.f32 %v1026, %v960
      %v1029 = vmax.f32 %v1027, %v966
      %v1030 = vmax.f32 %v1028, %v972
      %v1031 = vmax.f32 %v1029, %v978
      %v1032 = vmax.f32 %v1030, %v984
      %v1033 = vmax.f32 %v1031, %v990
      %v1034 = vmax.f32 %v1032, %v996
      %v1035 = vmax.f32 %v1033, %v1002
      %v1036 = vmax.f32 %v1034, %v1035
      %v1037 = vrot.slane %v1036, 4
      %v1038 = vmax.f32 %v1036, %v1037
      %v1039 = vrot.slane %v1038, 2
      %v1040 = vmax.f32 %v1038, %v1039
      %v1041 = vrot.slane %v1040, 1
      %v1042 = vmax.f32 %v1040, %v1041
      %v1043 = vmax.f32 %v818, %v830
      %v1044 = vmax.f32 %v824, %v836
      %v1045 = vmax.f32 %v1043, %v842
      %v1046 = vmax.f32 %v1044, %v848
      %v1047 = vmax.f32 %v1045, %v854
      %v1048 = vmax.f32 %v1046, %v860
      %v1049 = vmax.f32 %v1047, %v866
      %v1050 = vmax.f32 %v1048, %v872
      %v1051 = vmax.f32 %v1049, %v878
      %v1052 = vmax.f32 %v1050, %v884
      %v1053 = vmax.f32 %v1051, %v890
      %v1054 = vmax.f32 %v1052, %v896
      %v1055 = vmax.f32 %v1053, %v902
      %v1056 = vmax.f32 %v1054, %v908
      %v1057 = vmax.f32 %v1055, %v914
      %v1058 = vmax.f32 %v1056, %v920
      %v1059 = vmax.f32 %v1057, %v926
      %v1060 = vmax.f32 %v1058, %v932
      %v1061 = vmax.f32 %v1059, %v938
      %v1062 = vmax.f32 %v1060, %v944
      %v1063 = vmax.f32 %v1061, %v950
      %v1064 = vmax.f32 %v1062, %v956
      %v1065 = vmax.f32 %v1063, %v962
      %v1066 = vmax.f32 %v1064, %v968
      %v1067 = vmax.f32 %v1065, %v974
      %v1068 = vmax.f32 %v1066, %v980
      %v1069 = vmax.f32 %v1067, %v986
      %v1070 = vmax.f32 %v1068, %v992
      %v1071 = vmax.f32 %v1069, %v998
      %v1072 = vmax.f32 %v1070, %v1004
      %v1073 = vmax.f32 %v1071, %v1072
      %v1074 = vrot.slane %v1073, 4
      %v1075 = vmax.f32 %v1073, %v1074
      %v1076 = vrot.slane %v1075, 2
      %v1077 = vmax.f32 %v1075, %v1076
      %v1078 = vrot.slane %v1077, 1
      %v1079 = vmax.f32 %v1077, %v1078
      %v1080 = vsub.f32 %v816, %v1042
      %v1081 = vsub.f32 %v818, %v1079
      %v1082 = vsub.f32 %v822, %v1042
      %v1083 = vsub.f32 %v824, %v1079
      %v1084 = vsub.f32 %v828, %v1042
      %v1085 = vsub.f32 %v830, %v1079
      %v1086 = vsub.f32 %v834, %v1042
      %v1087 = vsub.f32 %v836, %v1079
      %v1088 = vsub.f32 %v840, %v1042
      %v1089 = vsub.f32 %v842, %v1079
      %v1090 = vsub.f32 %v846, %v1042
      %v1091 = vsub.f32 %v848, %v1079
      %v1092 = vsub.f32 %v852, %v1042
      %v1093 = vsub.f32 %v854, %v1079
      %v1094 = vsub.f32 %v858, %v1042
      %v1095 = vsub.f32 %v860, %v1079
      %v1096 = vsub.f32 %v864, %v1042
      %v1097 = vsub.f32 %v866, %v1079
      %v1098 = vsub.f32 %v870, %v1042
      %v1099 = vsub.f32 %v872, %v1079
      %v1100 = vsub.f32 %v876, %v1042
      %v1101 = vsub.f32 %v878, %v1079
      %v1102 = vsub.f32 %v882, %v1042
      %v1103 = vsub.f32 %v884, %v1079
      %v1104 = vsub.f32 %v888, %v1042
      %v1105 = vsub.f32 %v890, %v1079
      %v1106 = vsub.f32 %v894, %v1042
      %v1107 = vsub.f32 %v896, %v1079
      %v1108 = vsub.f32 %v900, %v1042
      %v1109 = vsub.f32 %v902, %v1079
      %v1110 = vsub.f32 %v906, %v1042
      %v1111 = vsub.f32 %v908, %v1079
      %v1112 = vsub.f32 %v912, %v1042
      %v1113 = vsub.f32 %v914, %v1079
      %v1114 = vsub.f32 %v918, %v1042
      %v1115 = vsub.f32 %v920, %v1079
      %v1116 = vsub.f32 %v924, %v1042
      %v1117 = vsub.f32 %v926, %v1079
      %v1118 = vsub.f32 %v930, %v1042
      %v1119 = vsub.f32 %v932, %v1079
      %v1120 = vsub.f32 %v936, %v1042
      %v1121 = vsub.f32 %v938, %v1079
      %v1122 = vsub.f32 %v942, %v1042
      %v1123 = vsub.f32 %v944, %v1079
      %v1124 = vsub.f32 %v948, %v1042
      %v1125 = vsub.f32 %v950, %v1079
      %v1126 = vsub.f32 %v954, %v1042
      %v1127 = vsub.f32 %v956, %v1079
      %v1128 = vsub.f32 %v960, %v1042
      %v1129 = vsub.f32 %v962, %v1079
      %v1130 = vsub.f32 %v966, %v1042
      %v1131 = vsub.f32 %v968, %v1079
      %v1132 = vsub.f32 %v972, %v1042
      %v1133 = vsub.f32 %v974, %v1079
      %v1134 = vsub.f32 %v978, %v1042
      %v1135 = vsub.f32 %v980, %v1079
      %v1136 = vsub.f32 %v984, %v1042
      %v1137 = vsub.f32 %v986, %v1079
      %v1138 = vsub.f32 %v990, %v1042
      %v1139 = vsub.f32 %v992, %v1079
      %v1140 = vsub.f32 %v996, %v1042
      %v1141 = vsub.f32 %v998, %v1079
      %v1142 = vsub.f32 %v1002, %v1042
      %v1143 = vsub.f32 %v1004, %v1079
      %v1144 = vpack.c.bf16 %v1082, %v1080
      %v1145 = vpack.c.bf16 %v1083, %v1081
      %v1146 = vpack.c.bf16 %v1086, %v1084
      %v1147 = vpack.c.bf16 %v1087, %v1085
      %v1148 = vpack.c.bf16 %v1090, %v1088
      %v1149 = vpack.c.bf16 %v1091, %v1089
      %v1150 = vpack.c.bf16 %v1094, %v1092
      %v1151 = vpack.c.bf16 %v1095, %v1093
      %v1152 = vpack.c.bf16 %v1098, %v1096
      %v1153 = vpack.c.bf16 %v1099, %v1097
      %v1154 = vpack.c.bf16 %v1102, %v1100
      %v1155 = vpack.c.bf16 %v1103, %v1101
      %v1156 = vpack.c.bf16 %v1106, %v1104
      %v1157 = vpack.c.bf16 %v1107, %v1105
      %v1158 = vpack.c.bf16 %v1110, %v1108
      %v1159 = vpack.c.bf16 %v1111, %v1109
      %v1160 = vpack.c.bf16 %v1114, %v1112
      %v1161 = vpack.c.bf16 %v1115, %v1113
      %v1162 = vpack.c.bf16 %v1118, %v1116
      %v1163 = vpack.c.bf16 %v1119, %v1117
      %v1164 = vpack.c.bf16 %v1122, %v1120
      %v1165 = vpack.c.bf16 %v1123, %v1121
      %v1166 = vpack.c.bf16 %v1126, %v1124
      %v1167 = vpack.c.bf16 %v1127, %v1125
      %v1168 = vpack.c.bf16 %v1130, %v1128
      %v1169 = vpack.c.bf16 %v1131, %v1129
      %v1170 = vpack.c.bf16 %v1134, %v1132
      %v1171 = vpack.c.bf16 %v1135, %v1133
      %v1172 = vpack.c.bf16 %v1138, %v1136
      %v1173 = vpack.c.bf16 %v1139, %v1137
      %v1174 = vpack.c.bf16 %v1142, %v1140
      %v1175 = vpack.c.bf16 %v1143, %v1141
      %v1177 = vmul.bf16 %v1144, 1069105081
      %v1178 = vpow.bf16.pop %v1177
      %v1180 = vmul.bf16 %v1145, 1069105081
      %v1181 = vpow.bf16.pop %v1180
      %v1183 = vmul.bf16 %v1146, 1069105081
      %v1184 = vpow.bf16.pop %v1183
      %v1186 = vmul.bf16 %v1147, 1069105081
      %v1187 = vpow.bf16.pop %v1186
      %v1189 = vmul.bf16 %v1148, 1069105081
      %v1190 = vpow.bf16.pop %v1189
      %v1192 = vmul.bf16 %v1149, 1069105081
      %v1193 = vpow.bf16.pop %v1192
      %v1195 = vmul.bf16 %v1150, 1069105081
      %v1196 = vpow.bf16.pop %v1195
      %v1198 = vmul.bf16 %v1151, 1069105081
      %v1199 = vpow.bf16.pop %v1198
      %v1201 = vmul.bf16 %v1152, 1069105081
      %v1202 = vpow.bf16.pop %v1201
      %v1204 = vmul.bf16 %v1153, 1069105081
      %v1205 = vpow.bf16.pop %v1204
      %v1207 = vmul.bf16 %v1154, 1069105081
      %v1208 = vpow.bf16.pop %v1207
      %v1210 = vmul.bf16 %v1155, 1069105081
      %v1211 = vpow.bf16.pop %v1210
      %v1213 = vmul.bf16 %v1156, 1069105081
      %v1214 = vpow.bf16.pop %v1213
      %v1216 = vmul.bf16 %v1157, 1069105081
      %v1217 = vpow.bf16.pop %v1216
      %v1219 = vmul.bf16 %v1158, 1069105081
      %v1220 = vpow.bf16.pop %v1219
      %v1222 = vmul.bf16 %v1159, 1069105081
      %v1223 = vpow.bf16.pop %v1222
      %v1225 = vmul.bf16 %v1160, 1069105081
      %v1226 = vpow.bf16.pop %v1225
      %v1228 = vmul.bf16 %v1161, 1069105081
      %v1229 = vpow.bf16.pop %v1228
      %v1231 = vmul.bf16 %v1162, 1069105081
      %v1232 = vpow.bf16.pop %v1231
      %v1234 = vmul.bf16 %v1163, 1069105081
      %v1235 = vpow.bf16.pop %v1234
      %v1237 = vmul.bf16 %v1164, 1069105081
      %v1238 = vpow.bf16.pop %v1237
      %v1240 = vmul.bf16 %v1165, 1069105081
      %v1241 = vpow.bf16.pop %v1240
      %v1243 = vmul.bf16 %v1166, 1069105081
      %v1244 = vpow.bf16.pop %v1243
      %v1246 = vmul.bf16 %v1167, 1069105081
      %v1247 = vpow.bf16.pop %v1246
      %v1249 = vmul.bf16 %v1168, 1069105081
      %v1250 = vpow.bf16.pop %v1249
      %v1252 = vmul.bf16 %v1169, 1069105081
      %v1253 = vpow.bf16.pop %v1252
      %v1255 = vmul.bf16 %v1170, 1069105081
      %v1256 = vpow.bf16.pop %v1255
      %v1258 = vmul.bf16 %v1171, 1069105081
      %v1259 = vpow.bf16.pop %v1258
      %v1261 = vmul.bf16 %v1172, 1069105081
      %v1262 = vpow.bf16.pop %v1261
      %v1264 = vmul.bf16 %v1173, 1069105081
      %v1265 = vpow.bf16.pop %v1264
      %v1267 = vmul.bf16 %v1174, 1069105081
      %v1268 = vpow.bf16.pop %v1267
      %v1270 = vmul.bf16 %v1175, 1069105081
      %v1271 = vpow.bf16.pop %v1270
      %v1272 = vld [vmem:[#allocation3] sm:$0x77]
      %v1274 = vunpack.c.l.b16 %v1272
      %v1275 = vunpack.c.h.b16 %v1272
      %v1276 = vpack.c.b16 %v1274, %v1274
      %v1277 = vpack.c.b16 %v1275, %v1275
      %1280 = vmatprep.subr.bf16.mxu0 %v1181
      %1281 = vmatpush1.bf16.msra.mxu0 %v1178
      %1282 = vmatprep.subr.bf16.mxu0 %v1187
      %1283 = vmatpush1.bf16.msra.mxu0 %v1184
      %1284 = vmatprep.subr.bf16.mxu0 %v1193
      %1285 = vmatpush1.bf16.msra.mxu0 %v1190
      %1286 = vmatprep.subr.bf16.mxu0 %v1199
      %1287 = vmatpush1.bf16.msra.mxu0 %v1196
      %1288 = vmatprep.subr.bf16.mxu0 %v1205
      %1289 = vmatpush1.bf16.msra.mxu0 %v1202
      %1290 = vmatprep.subr.bf16.mxu0 %v1211
      %1291 = vmatpush1.bf16.msra.mxu0 %v1208
      %1292 = vmatprep.subr.bf16.mxu0 %v1217
      %1293 = vmatpush1.bf16.msra.mxu0 %v1214
      %1294 = vmatprep.subr.bf16.mxu0 %v1223
      %1295 = vmatpush1.bf16.msra.mxu0 %v1220
      %1296 = vmatprep.subr.bf16.mxu0 %v1229
      %1297 = vmatpush1.bf16.msra.mxu0 %v1226
      %1298 = vmatprep.subr.bf16.mxu0 %v1235
      %1299 = vmatpush1.bf16.msra.mxu0 %v1232
      %1300 = vmatprep.subr.bf16.mxu0 %v1241
      %1301 = vmatpush1.bf16.msra.mxu0 %v1238
      %1302 = vmatprep.subr.bf16.mxu0 %v1247
      %1303 = vmatpush1.bf16.msra.mxu0 %v1244
      %1304 = vmatprep.subr.bf16.mxu0 %v1253
      %1305 = vmatpush1.bf16.msra.mxu0 %v1250
      %1306 = vmatprep.subr.bf16.mxu0 %v1259
      %1307 = vmatpush1.bf16.msra.mxu0 %v1256
      %1308 = vmatprep.subr.bf16.mxu0 %v1265
      %1309 = vmatpush1.bf16.msra.mxu0 %v1262
      %1310 = vmatprep.subr.bf16.mxu0 %v1271
      %1311 = vmatpush1.bf16.msra.mxu0 %v1268
      %1312 = vmatprep.mubr.bf16.mxu0 %v1277
      %1313 = vmatmul.mubr.bf16.gmra.mrb[0].mxu0 %v1276
      %v1314 = vpop.f32.mrb[0].mxu0
      %v1315 = vadd.f32 0.0, %v1314
      %v1316 = vpop.f32.mrb[0].mxu0
      %v1317 = vadd.f32 0.0, %v1316
      %v1318 = vpop.f32.mrb[0].mxu0
      %v1319 = vpop.f32.mrb[0].mxu0
      %1320 = vdwg.mxu0
      %v1321 = vrcp.pop %v1315
      %v1322 = vrcp.pop %v1317
      %v1323 = vlaneseq
      %v1324 = vshrl.u32 %v1323, 7
      %v1325 = vsub.s32 4, %v1324
      %v1326 = vrot.slane %v1321, %v1325
      %v1327 = vlaneseq
      %v1328 = vshrl.u32 %v1327, 7
      %v1329 = vsub.s32 4, %v1328
      %v1330 = vrot.slane %v1322, %v1329
      %v1331 = vmul.f32 %v1315, %v1326
      %v1332 = vmul.f32 %v1317, %v1330
      %v1335 = vrot.slane %v1331, 3
      %v1336 = vrot.slane %v1332, 3
      %v1339 = vadd.f32 %v569, %v1335
      %v1340 = vadd.f32 %v571, %v1336
      %v1341 = vadd.f32 %v575, %v1335
      %v1342 = vadd.f32 %v577, %v1336
      %v1347 = vcombine.high %v1339, %v1340
      %v1348 = vcombine.low %v1341, %v1342
      %vm1349 = vcmask 1042432
      %vm1350 = vcmask 1046532
      %vm1351 = vmor %vm1349, %vm1350
      %v1352 = vrot.slane %v1347, 5
      %v1353 = vrot.slane %v1352, 4
      %v1354 = vrot.slane %v1348, 5
      %v1355 = vsel %vm1351, %v1353, %v1354
      %1357 = vst [vmem:[%s309] sm:$0xff] %v1355
      %s1358 = smul.u32 2, %s22
      %p1359 = scmp.lt.s32.totalorder %s21, 1
      %s1360 = scalar_select %p1359, %s21, 1
      %p1361 = scmp.lt.s32.totalorder %s1358, 1
      %s1362 = scalar_select %p1361, %s1358, 1
      %s1363 = smul.addr %s1360, 2
      %s1364 = sadd.s32 %s1362, %s1363
      %s1365 = smul.addr %s1364, 4
      %s1366 = scalar_lea.vmem %s6, %s1365
      // Predicated region
      $region49: #{gpa_forward.1} parent=43 // pred_check
        %p1367 = pneg %p187
      $region50: #{gpa_forward.1} parent=43 // pred_check_branch
        %1369 = sbr.rel (%p1367) target = $region52
      $region51: #{gpa_forward.1} parent=43 // pred_region
        %s1370 = smul.u32 2, %s22
      $region52: #{gpa_forward.1} parent=43 // pred_fallthru
        _
    $region44: #{gpa_forward.1} parent=5 // pred_fallthru
      _
    %p1371 = scmp.le.s32.totalorder 2, %s12
    // Predicated region
    $region53: #{gpa_forward.1} parent=5 // pred_check
      %p1372 = pneg %p1371
    $region54: #{gpa_forward.1} parent=5 // pred_check_branch
      %1374 = sbr.rel (%p1372) target = $region56
    $region55: #{gpa_forward.1} parent=5 // pred_region
      %s1375 = ssub.s32 %s12, 2
      // Predicated region
      $region57: #{gpa_forward.1} parent=55 // pred_check
        %p1376 = pneg %p193
      $region58: #{gpa_forward.1} parent=55 // pred_check_branch
        %1378 = sbr.rel (%p1376) target = $region60
      $region59: #{gpa_forward.1} parent=55 // pred_region
        %s1379 = smul.u32 2, %s24
        %p1380 = scmp.lt.s32.totalorder %s23, 1
        %s1381 = scalar_select %p1380, %s23, 1
        %p1382 = scmp.lt.s32.totalorder %s1379, 1
        %s1383 = scalar_select %p1382, %s1379, 1
        %s1384 = smul.addr %s1381, 2
        %s1385 = sadd.s32 %s1383, %s1384
        %s1386 = smul.addr %s1385, 4
        %s1387 = scalar_lea.vmem %s6, %s1386
      $region60: #{gpa_forward.1} parent=55 // pred_fallthru
        _
    $region56: #{gpa_forward.1} parent=5 // pred_fallthru
      _
  $region6: #{gpa_forward.1} parent=0 // loop_footer
    %s16 = sadd.s32 1, %s12
  $region7: #{gpa_forward.1} parent=0 // loop_footer_branch
    %11 = sbr.rel target = $region3
  $region8: #{gpa_forward.1} parent=0 // loop_exit
    _

</llo_original>
